<compile_context>
chip_gen: v5e
topology: v5e:2x2
jax: 0.10.0
libtpu: 0.0.40
codegen_flags: <defaults>
</compile_context>

<pallas_src>
import jax
import jax.numpy as jnp
import numpy as np
from jax.experimental import pallas as pl
from jax.experimental.pallas import tpu as pltpu


def _round_up(x, m):
    return ((x + m - 1) // m) * m


# --------------------------------------------------------------------------
# Pallas kernel: whole forward pass of PCDecoder for one decoding step.
# Single invocation (no grid); every operand lives fully in VMEM.
# --------------------------------------------------------------------------
def make_pc_decoder_kernel(cfg):
    H, L, T = cfg["H"], cfg["L"], cfg["T"]
    n_y, P, OW = cfg["n_y"], cfg["P"], cfg["OW"]
    r_attn, r_fus, r_lin = cfg["r_attn"], cfg["r_fus"], cfg["r_lin"]
    r_wih0, r_wihr, r_whh = cfg["r_wih0"], cfg["r_wihr"], cfg["r_whh"]
    r_b = cfg["r_bias"]

    def kernel(acts_ref, h_ref, enc_ref, xe_ref, w_ref, out_ref):
        f32 = jnp.float32
        dot = lambda a, b: jnp.dot(a, b, preferred_element_type=f32)

        # ---------------- Attention (x_e precomputed in wrapper) ----------------
        h_last = h_ref[L - 1]                                    # [B, H]
        x_h = dot(h_last, w_ref[r_attn:r_attn + H, :H])          # [B, H]
        s = jnp.tanh(xe_ref[...] + x_h[:, None, :])              # [B, T, H]
        v = w_ref[r_b:r_b + 1, :H]                               # [1, H]
        logits = jnp.sum(s * v[:, None, :], axis=-1)             # [B, T]
        m = jnp.max(logits, axis=-1, keepdims=True)
        e = jnp.exp(logits - m)
        a = e / jnp.sum(e, axis=-1, keepdims=True)               # softmax over T

        # context c = bmm(a[:,None,:], enc) -> [B, 2H]
        c = jnp.einsum("bqt,btd->bqd", a[:, None, :], enc_ref[...],
                       preferred_element_type=f32)[:, 0, :]

        # ---------------- Fusion: one block-diagonal dot -> [q | u] -------------
        b_fus = w_ref[r_b + 1:r_b + 2, :2 * H]                   # [1, 2H]
        qu = jnp.maximum(
            dot(acts_ref[...], w_ref[r_fus:r_fus + P, :2 * H]) + b_fus, 0.0)

        # GRU input in [q | u | c] order (weights row-permuted to match);
        # stays in vregs — no scratch store/load round trip.
        x = jnp.concatenate([qu, c], axis=1)                     # [B, 4H]

        # ---------------- GRU (fused r|z|n gates) ----------------
        hs = []
        for l in range(L):
            h_prev = h_ref[l]                                    # [B, H]
            if l == 0:
                wih = w_ref[r_wih0:r_wih0 + 4 * H, :3 * H]       # [4H, 3H]
            else:
                base = r_wihr + (l - 1) * H
                wih = w_ref[base:base + H, :3 * H]               # [H, 3H]
            whh = w_ref[r_whh + l * H:r_whh + (l + 1) * H, :3 * H]
            gi = dot(x, wih) + w_ref[r_b + 3 + l:r_b + 4 + l, :3 * H]
            gh = dot(h_prev, whh) + w_ref[r_b + 3 + L + l:r_b + 4 + L + l, :3 * H]
            rz = jax.nn.sigmoid(gi[:, :2 * H] + gh[:, :2 * H])   # one sigmoid for r|z
            r = rz[:, :H]
            z = rz[:, H:]
            n = jnp.tanh(gi[:, 2 * H:] + r * gh[:, 2 * H:])      # PyTorch gate order
            x = (1.0 - z) * n + z * h_prev
            hs.append(x)

        # -------- Output linear on [dec_out | u | c] (rows permuted to match) ---
        lin_in = jnp.concatenate([x, qu[:, H:2 * H], c], axis=1)  # [B, 4H]
        y = dot(lin_in, w_ref[r_lin:r_lin + 4 * H, :n_y]) \
            + w_ref[r_b + 2:r_b + 3, :n_y]

        # -------- Single lane-dense packed output store --------
        used = n_y + L * H + T
        pieces = [y] + hs + [a]
        if OW > used:
            pieces.append(jnp.zeros((y.shape[0], OW - used), f32))
        out_ref[...] = jnp.concatenate(pieces, axis=1).astype(out_ref.dtype)

    return kernel


# --------------------------------------------------------------------------
# One-time weight packing (pure layout glue): everything into one [R, 3H]
# lane-dense f32 buffer + the step-invariant encoder-projection weight.
# --------------------------------------------------------------------------
def pack_pc_decoder_params(prm, num_p, n_y):
    H, L = prm["n_hid"], prm["L"]
    WC = max(3 * H, 2 * H, n_y)                     # packed buffer lane width
    P = _round_up(num_p + n_y, 8)

    attn_wT = prm["attn_w"].T                       # [3H, H]

    def col_pad(arr):
        arr = arr.astype(jnp.float32)
        return jnp.pad(arr, ((0, 0), (0, WC - arr.shape[1])))

    def perm_rows(wT):   # rows ordered [x(0:H), c(H:3H), u(3H:4H)] -> [x, u, c]
        return jnp.concatenate([wT[:H], wT[3 * H:], wT[H:3 * H]], axis=0)

    # fusion block-diagonal weight: cat(p, y0) @ BD -> [q | u]
    bd = jnp.zeros((P, 2 * H), jnp.float32)
    bd = bd.at[:num_p, :H].set(prm["fc_p_w"].T)
    bd = bd.at[num_p:num_p + n_y, H:].set(prm["fc_y_w"].T)

    sections, offs = [], {}
    row = 0

    def add(name, arr):
        nonlocal row
        offs[name] = row
        sections.append(col_pad(arr))
        row += arr.shape[0]

    add("attn", attn_wT[:H, :])                                   # [H, H]
    add("fus", bd)                                                # [P, 2H]
    add("lin", perm_rows(prm["lin_w"].T))                         # [4H, n_y]
    add("wih0", perm_rows(prm["gru"][0][0].T))                    # [4H, 3H]
    offs["wihr"] = row
    if L > 1:
        add("wihr", jnp.concatenate(
            [prm["gru"][l][0].T for l in range(1, L)], axis=0))   # [(L-1)H, 3H]
    add("whh", jnp.concatenate(
        [prm["gru"][l][1].T for l in range(L)], axis=0))          # [L*H, 3H]

    bias_rows = [prm["v_w"].reshape(1, H),
                 jnp.concatenate([prm["fc_p_b"], prm["fc_y_b"]]).reshape(1, 2 * H),
                 prm["lin_b"].reshape(1, n_y)]
    bias_rows += [prm["gru"][l][2].reshape(1, 3 * H) for l in range(L)]
    bias_rows += [prm["gru"][l][3].reshape(1, 3 * H) for l in range(L)]
    add("bias", jnp.concatenate([col_pad(b) for b in bias_rows], axis=0))

    W = jnp.concatenate(sections, axis=0)
    R = _round_up(W.shape[0], 8)
    W = jnp.pad(W, ((0, R - W.shape[0]), (0, 0)))

    return dict(W=W, H=H, L=L, n_y=n_y, num_p=num_p, P=P, WC=WC,
                attn_enc_wT=attn_wT[H:, :],
                r_attn=offs["attn"], r_fus=offs["fus"], r_lin=offs["lin"],
                r_wih0=offs["wih0"], r_wihr=offs["wihr"], r_whh=offs["whh"],
                r_bias=offs["bias"])


# --------------------------------------------------------------------------
# Per-step wrapper: computes the step-invariant encoder projection, builds the
# padded activation vector and invokes the Pallas kernel once.
# --------------------------------------------------------------------------
def pc_decoder_forward(y0, p, h, enc, packed):
    H, L = packed["H"], packed["L"]
    n_y, num_p, P = packed["n_y"], packed["num_p"], packed["P"]
    B, T, _ = enc.shape

    # Step-invariant encoder projection (hoisted out of the kernel; in a real
    # multi-step decode loop compute this once per sequence).
    x_e = jnp.einsum("btd,dh->bth", enc, packed["attn_enc_wT"])   # [B, T, H]

    acts = jnp.concatenate([p, y0], axis=1)                       # [B, num_p+n_y]
    acts = jnp.pad(acts, ((0, 0), (0, P - (num_p + n_y))))        # [B, P]

    used = n_y + L * H + T
    OW = _round_up(max(used, 128), 128)

    cfg = dict(packed)
    cfg["T"], cfg["OW"] = T, OW

    vmem = pl.BlockSpec(memory_space=pltpu.MemorySpace.VMEM)
    out = pl.pallas_call(
        make_pc_decoder_kernel(cfg),
        out_shape=jax.ShapeDtypeStruct((B, OW), jnp.float32),
        in_specs=[vmem] * 5,
        out_specs=vmem,
    )(acts, h, enc, x_e, packed["W"])

    y = out[:, :n_y]
    dec_h = jnp.stack([out[:, n_y + l * H:n_y + (l + 1) * H] for l in range(L)])
    a = out[:, n_y + L * H:used]
    return y, dec_h, a


# --------------------------------------------------------------------------
# Pure-JAX reference (mirrors the PyTorch forward exactly) for verification.
# --------------------------------------------------------------------------
def ref_forward(y0, p, h, enc, prm):
    H = prm["n_hid"]
    B, T, _ = enc.shape
    h_last = h[-1]
    h_rep = jnp.repeat(h_last[:, None, :], T, axis=1)
    s = jnp.tanh(jnp.concatenate([h_rep, enc], axis=2) @ prm["attn_w"].T)
    logits = (s @ prm["v_w"].T)[..., 0]
    a = jax.nn.softmax(logits, axis=1)
    c = jnp.einsum("bt,btd->bd", a, enc)
    q = jax.nn.relu(p @ prm["fc_p_w"].T + prm["fc_p_b"])
    u = jax.nn.relu(y0 @ prm["fc_y_w"].T + prm["fc_y_b"])
    x = jnp.concatenate([q, c, u], axis=1)
    dec_h = []
    for l in range(prm["L"]):
        Wih, Whh, bih, bhh = prm["gru"][l]
        hp = h[l]
        gi = x @ Wih.T + bih
        gh = hp @ Whh.T + bhh
        r = jax.nn.sigmoid(gi[:, :H] + gh[:, :H])
        z = jax.nn.sigmoid(gi[:, H:2 * H] + gh[:, H:2 * H])
        n = jnp.tanh(gi[:, 2 * H:] + r * gh[:, 2 * H:])
        hn = (1.0 - z) * n + z * hp
        dec_h.append(hn)
        x = hn
    y = jnp.concatenate([x, c, u], axis=1) @ prm["lin_w"].T + prm["lin_b"]
    return y, jnp.stack(dec_h), a


def init_params(key, num_p, n_hid, n_y, num_layers):
    keys = iter(jax.random.split(key, 16 + 4 * num_layers))

    def nrm(shape, scale=0.2):
        return (scale * jax.random.normal(next(keys), shape)).astype(jnp.float32)

    H = n_hid
    gru = []
    for l in range(num_layers):
        in_sz = 4 * H if l == 0 else H
        gru.append((nrm((3 * H, in_sz)), nrm((3 * H, H)),
                    nrm((3 * H,)), nrm((3 * H,))))
    return dict(
        n_hid=H, L=num_layers,
        attn_w=nrm((H, 3 * H)),
        v_w=nrm((1, H)),
        fc_p_w=nrm((H, num_p)), fc_p_b=nrm((H,)),
        fc_y_w=nrm((H, n_y)), fc_y_b=nrm((H,)),
        gru=gru,
        lin_w=nrm((n_y, 4 * H)), lin_b=nrm((n_y,)),
    )


if __name__ == "__main__":
    B, num_p, n_hid, n_y, num_layers, past_len = 2, 4, 32, 8, 2, 8

    key = jax.random.PRNGKey(0)
    k_in, k_prm = jax.random.split(key)
    k1, k2, k3, k4 = jax.random.split(k_in, 4)
    y0 = jax.random.normal(k1, (B, n_y), jnp.float32)
    p = jax.random.normal(k2, (B, num_p), jnp.float32)
    h = jax.random.normal(k3, (num_layers, B, n_hid), jnp.float32)
    enc = jax.random.normal(k4, (B, past_len, 2 * n_hid), jnp.float32)

    prm = init_params(k_prm, num_p, n_hid, n_y, num_layers)
    packed = pack_pc_decoder_params(prm, num_p, n_y)

    y, dec_h, a = jax.block_until_ready(
        pc_decoder_forward(y0, p, h, enc, packed))

    y_r, dh_r, a_r = ref_forward(y0, p, h, enc, prm)
    assert np.allclose(np.asarray(y), np.asarray(y_r), atol=1e-4, rtol=1e-4)
    assert np.allclose(np.asarray(dec_h), np.asarray(dh_r), atol=1e-4, rtol=1e-4)
    assert np.allclose(np.asarray(a), np.asarray(a_r), atol=1e-4, rtol=1e-4)

    print("KERNEL_OK")
</pallas_src>

<mosaic_0001>
module attributes {stable_mosaic.version = 11 : i64} {
  func.func @kernel(%arg0: memref<2x16xf32, #tpu.memory_space<vmem>>, %arg1: memref<2x2x32xf32, #tpu.memory_space<vmem>>, %arg2: memref<2x8x64xf32, #tpu.memory_space<vmem>>, %arg3: memref<2x8x32xf32, #tpu.memory_space<vmem>>, %arg4: memref<408x96xf32, #tpu.memory_space<vmem>>, %arg5: memref<2x128xf32, #tpu.memory_space<vmem>>) attributes {dimension_semantics = [], scalar_prefetch = 0 : i64, scratch_operands = 0 : i64, tpu.core_type = #tpu.core_type<tc>} {
    %c1 = arith.constant 1 : index
    %c0 = arith.constant 0 : index
    %c0_0 = arith.constant 0 : index
    %0 = vector.load %arg1[%c1, %c0, %c0_0] : memref<2x2x32xf32, #tpu.memory_space<vmem>>, vector<1x2x32xf32>
    %1 = vector.shape_cast %0 : vector<1x2x32xf32> to vector<2x32xf32>
    %c0_1 = arith.constant 0 : index
    %c0_2 = arith.constant 0 : index
    %2 = vector.load %arg4[%c0_1, %c0_2] : memref<408x96xf32, #tpu.memory_space<vmem>>, vector<32x32xf32>
    %cst = arith.constant dense<0.000000e+00> : vector<2x32xf32>
    %3 = tpu.matmul %1, %2, %cst {dimension_numbers = #tpu.dot_dimension_numbers<[1], [0], [0], [1], [0, 0, 1, 1], [], []>} : vector<2x32xf32>, vector<32x32xf32>, vector<2x32xf32> -> vector<2x32xf32>
    %c0_3 = arith.constant 0 : index
    %c0_4 = arith.constant 0 : index
    %c0_5 = arith.constant 0 : index
    %4 = vector.load %arg3[%c0_3, %c0_4, %c0_5] : memref<2x8x32xf32, #tpu.memory_space<vmem>>, vector<2x8x32xf32>
    %5 = vector.shape_cast %3 : vector<2x32xf32> to vector<2x1x32xf32>
    %6 = vector.broadcast %5 : vector<2x1x32xf32> to vector<2x8x32xf32>
    %7 = arith.addf %4, %6 : vector<2x8x32xf32>
    %8 = math.tanh %7 : vector<2x8x32xf32>
    %c400 = arith.constant 400 : index
    %c0_6 = arith.constant 0 : index
    %9 = vector.load %arg4[%c400, %c0_6] : memref<408x96xf32, #tpu.memory_space<vmem>>, vector<1x32xf32>
    %10 = vector.shape_cast %9 : vector<1x32xf32> to vector<1x1x32xf32>
    %11 = vector.broadcast %10 : vector<1x1x32xf32> to vector<2x8x32xf32>
    %12 = arith.mulf %8, %11 : vector<2x8x32xf32>
    %cst_7 = arith.constant dense<0.000000e+00> : vector<2x8xf32>
    %13 = vector.multi_reduction <add>, %12, %cst_7 [2] : vector<2x8x32xf32> to vector<2x8xf32>
    %cst_8 = arith.constant dense<0xFF800000> : vector<2xf32>
    %14 = vector.multi_reduction <maximumf>, %13, %cst_8 [1] : vector<2x8xf32> to vector<2xf32>
    %15 = vector.shape_cast %14 : vector<2xf32> to vector<2x1xf32>
    %16 = vector.broadcast %15 : vector<2x1xf32> to vector<2x8xf32>
    %17 = arith.subf %13, %16 : vector<2x8xf32>
    %18 = math.exp %17 : vector<2x8xf32>
    %cst_9 = arith.constant dense<0.000000e+00> : vector<2xf32>
    %19 = vector.multi_reduction <add>, %18, %cst_9 [1] : vector<2x8xf32> to vector<2xf32>
    %20 = vector.shape_cast %19 : vector<2xf32> to vector<2x1xf32>
    %21 = vector.broadcast %20 : vector<2x1xf32> to vector<2x8xf32>
    %22 = arith.divf %18, %21 : vector<2x8xf32>
    %23 = vector.shape_cast %22 : vector<2x8xf32> to vector<2x1x8xf32>
    %c0_10 = arith.constant 0 : index
    %c0_11 = arith.constant 0 : index
    %c0_12 = arith.constant 0 : index
    %24 = vector.load %arg2[%c0_10, %c0_11, %c0_12] : memref<2x8x64xf32, #tpu.memory_space<vmem>>, vector<2x8x64xf32>
    "tpu.trace_start"() <{level = 10 : i32, message = "bqt,btd->bqd"}> : () -> ()
    %cst_13 = arith.constant dense<0.000000e+00> : vector<2x1x64xf32>
    %25 = tpu.matmul %23, %24, %cst_13 {dimension_numbers = #tpu.dot_dimension_numbers<[2], [1], [1], [2], [0, 0, 0, 1, 1, 2], [0], [0]>} : vector<2x1x8xf32>, vector<2x8x64xf32>, vector<2x1x64xf32> -> vector<2x1x64xf32>
    "tpu.trace_stop"() : () -> ()
    %26 = vector.shape_cast %25 : vector<2x1x64xf32> to vector<2x64xf32>
    %c401 = arith.constant 401 : index
    %c0_14 = arith.constant 0 : index
    %27 = vector.load %arg4[%c401, %c0_14] : memref<408x96xf32, #tpu.memory_space<vmem>>, vector<1x64xf32>
    %c0_15 = arith.constant 0 : index
    %c0_16 = arith.constant 0 : index
    %28 = vector.load %arg0[%c0_15, %c0_16] : memref<2x16xf32, #tpu.memory_space<vmem>>, vector<2x16xf32>
    %c32 = arith.constant 32 : index
    %c0_17 = arith.constant 0 : index
    %29 = vector.load %arg4[%c32, %c0_17] : memref<408x96xf32, #tpu.memory_space<vmem>>, vector<16x64xf32>
    %cst_18 = arith.constant dense<0.000000e+00> : vector<2x64xf32>
    %30 = tpu.matmul %28, %29, %cst_18 {dimension_numbers = #tpu.dot_dimension_numbers<[1], [0], [0], [1], [0, 0, 1, 1], [], []>} : vector<2x16xf32>, vector<16x64xf32>, vector<2x64xf32> -> vector<2x64xf32>
    %31 = vector.broadcast %27 : vector<1x64xf32> to vector<2x64xf32>
    %32 = arith.addf %30, %31 : vector<2x64xf32>
    %cst_19 = arith.constant 0.000000e+00 : f32
    %33 = vector.broadcast %cst_19 : f32 to vector<2x64xf32>
    %34 = arith.maximumf %32, %33 : vector<2x64xf32>
    %35 = tpu.concatenate %34, %26 in 1 : vector<2x64xf32>, vector<2x64xf32> -> vector<2x128xf32>
    %c0_20 = arith.constant 0 : index
    %c0_21 = arith.constant 0 : index
    %c0_22 = arith.constant 0 : index
    %36 = vector.load %arg1[%c0_20, %c0_21, %c0_22] : memref<2x2x32xf32, #tpu.memory_space<vmem>>, vector<1x2x32xf32>
    %37 = vector.shape_cast %36 : vector<1x2x32xf32> to vector<2x32xf32>
    %c176 = arith.constant 176 : index
    %c0_23 = arith.constant 0 : index
    %38 = vector.load %arg4[%c176, %c0_23] : memref<408x96xf32, #tpu.memory_space<vmem>>, vector<128x96xf32>
    %c336 = arith.constant 336 : index
    %c0_24 = arith.constant 0 : index
    %39 = vector.load %arg4[%c336, %c0_24] : memref<408x96xf32, #tpu.memory_space<vmem>>, vector<32x96xf32>
    %cst_25 = arith.constant dense<0.000000e+00> : vector<2x96xf32>
    %40 = tpu.matmul %35, %38, %cst_25 {dimension_numbers = #tpu.dot_dimension_numbers<[1], [0], [0], [1], [0, 0, 1, 1], [], []>} : vector<2x128xf32>, vector<128x96xf32>, vector<2x96xf32> -> vector<2x96xf32>
    %c403 = arith.constant 403 : index
    %c0_26 = arith.constant 0 : index
    %41 = vector.load %arg4[%c403, %c0_26] : memref<408x96xf32, #tpu.memory_space<vmem>>, vector<1x96xf32>
    %42 = vector.broadcast %41 : vector<1x96xf32> to vector<2x96xf32>
    %43 = arith.addf %40, %42 : vector<2x96xf32>
    %cst_27 = arith.constant dense<0.000000e+00> : vector<2x96xf32>
    %44 = tpu.matmul %37, %39, %cst_27 {dimension_numbers = #tpu.dot_dimension_numbers<[1], [0], [0], [1], [0, 0, 1, 1], [], []>} : vector<2x32xf32>, vector<32x96xf32>, vector<2x96xf32> -> vector<2x96xf32>
    %c405 = arith.constant 405 : index
    %c0_28 = arith.constant 0 : index
    %45 = vector.load %arg4[%c405, %c0_28] : memref<408x96xf32, #tpu.memory_space<vmem>>, vector<1x96xf32>
    %46 = vector.broadcast %45 : vector<1x96xf32> to vector<2x96xf32>
    %47 = arith.addf %44, %46 : vector<2x96xf32>
    %48 = vector.extract_strided_slice %43 {offsets = [0, 0], sizes = [2, 64], strides = [1, 1]} : vector<2x96xf32> to vector<2x64xf32>
    %49 = vector.extract_strided_slice %47 {offsets = [0, 0], sizes = [2, 64], strides = [1, 1]} : vector<2x96xf32> to vector<2x64xf32>
    %50 = arith.addf %48, %49 : vector<2x64xf32>
    %51 = arith.negf %50 : vector<2x64xf32>
    %52 = math.exp %51 : vector<2x64xf32>
    %cst_29 = arith.constant 1.000000e+00 : f32
    %53 = vector.broadcast %cst_29 : f32 to vector<2x64xf32>
    %54 = arith.addf %53, %52 : vector<2x64xf32>
    %55 = arith.divf %53, %54 : vector<2x64xf32>
    %56 = vector.extract_strided_slice %55 {offsets = [0, 0], sizes = [2, 32], strides = [1, 1]} : vector<2x64xf32> to vector<2x32xf32>
    %57 = vector.extract_strided_slice %55 {offsets = [0, 32], sizes = [2, 32], strides = [1, 1]} : vector<2x64xf32> to vector<2x32xf32>
    %58 = vector.extract_strided_slice %43 {offsets = [0, 64], sizes = [2, 32], strides = [1, 1]} : vector<2x96xf32> to vector<2x32xf32>
    %59 = vector.extract_strided_slice %47 {offsets = [0, 64], sizes = [2, 32], strides = [1, 1]} : vector<2x96xf32> to vector<2x32xf32>
    %60 = arith.mulf %56, %59 : vector<2x32xf32>
    %61 = arith.addf %58, %60 : vector<2x32xf32>
    %62 = math.tanh %61 : vector<2x32xf32>
    %cst_30 = arith.constant 1.000000e+00 : f32
    %63 = vector.broadcast %cst_30 : f32 to vector<2x32xf32>
    %64 = arith.subf %63, %57 : vector<2x32xf32>
    %65 = arith.mulf %64, %62 : vector<2x32xf32>
    %66 = arith.mulf %57, %37 : vector<2x32xf32>
    %67 = arith.addf %65, %66 : vector<2x32xf32>
    %c1_31 = arith.constant 1 : index
    %c0_32 = arith.constant 0 : index
    %c0_33 = arith.constant 0 : index
    %68 = vector.load %arg1[%c1_31, %c0_32, %c0_33] : memref<2x2x32xf32, #tpu.memory_space<vmem>>, vector<1x2x32xf32>
    %69 = vector.shape_cast %68 : vector<1x2x32xf32> to vector<2x32xf32>
    %c304 = arith.constant 304 : index
    %c0_34 = arith.constant 0 : index
    %70 = vector.load %arg4[%c304, %c0_34] : memref<408x96xf32, #tpu.memory_space<vmem>>, vector<32x96xf32>
    %c368 = arith.constant 368 : index
    %c0_35 = arith.constant 0 : index
    %71 = vector.load %arg4[%c368, %c0_35] : memref<408x96xf32, #tpu.memory_space<vmem>>, vector<32x96xf32>
    %cst_36 = arith.constant dense<0.000000e+00> : vector<2x96xf32>
    %72 = tpu.matmul %67, %70, %cst_36 {dimension_numbers = #tpu.dot_dimension_numbers<[1], [0], [0], [1], [0, 0, 1, 1], [], []>} : vector<2x32xf32>, vector<32x96xf32>, vector<2x96xf32> -> vector<2x96xf32>
    %c404 = arith.constant 404 : index
    %c0_37 = arith.constant 0 : index
    %73 = vector.load %arg4[%c404, %c0_37] : memref<408x96xf32, #tpu.memory_space<vmem>>, vector<1x96xf32>
    %74 = vector.broadcast %73 : vector<1x96xf32> to vector<2x96xf32>
    %75 = arith.addf %72, %74 : vector<2x96xf32>
    %cst_38 = arith.constant dense<0.000000e+00> : vector<2x96xf32>
    %76 = tpu.matmul %69, %71, %cst_38 {dimension_numbers = #tpu.dot_dimension_numbers<[1], [0], [0], [1], [0, 0, 1, 1], [], []>} : vector<2x32xf32>, vector<32x96xf32>, vector<2x96xf32> -> vector<2x96xf32>
    %c406 = arith.constant 406 : index
    %c0_39 = arith.constant 0 : index
    %77 = vector.load %arg4[%c406, %c0_39] : memref<408x96xf32, #tpu.memory_space<vmem>>, vector<1x96xf32>
    %78 = vector.broadcast %77 : vector<1x96xf32> to vector<2x96xf32>
    %79 = arith.addf %76, %78 : vector<2x96xf32>
    %80 = vector.extract_strided_slice %75 {offsets = [0, 0], sizes = [2, 64], strides = [1, 1]} : vector<2x96xf32> to vector<2x64xf32>
    %81 = vector.extract_strided_slice %79 {offsets = [0, 0], sizes = [2, 64], strides = [1, 1]} : vector<2x96xf32> to vector<2x64xf32>
    %82 = arith.addf %80, %81 : vector<2x64xf32>
    %83 = arith.negf %82 : vector<2x64xf32>
    %84 = math.exp %83 : vector<2x64xf32>
    %cst_40 = arith.constant 1.000000e+00 : f32
    %85 = vector.broadcast %cst_40 : f32 to vector<2x64xf32>
    %86 = arith.addf %85, %84 : vector<2x64xf32>
    %87 = arith.divf %85, %86 : vector<2x64xf32>
    %88 = vector.extract_strided_slice %87 {offsets = [0, 0], sizes = [2, 32], strides = [1, 1]} : vector<2x64xf32> to vector<2x32xf32>
    %89 = vector.extract_strided_slice %87 {offsets = [0, 32], sizes = [2, 32], strides = [1, 1]} : vector<2x64xf32> to vector<2x32xf32>
    %90 = vector.extract_strided_slice %75 {offsets = [0, 64], sizes = [2, 32], strides = [1, 1]} : vector<2x96xf32> to vector<2x32xf32>
    %91 = vector.extract_strided_slice %79 {offsets = [0, 64], sizes = [2, 32], strides = [1, 1]} : vector<2x96xf32> to vector<2x32xf32>
    %92 = arith.mulf %88, %91 : vector<2x32xf32>
    %93 = arith.addf %90, %92 : vector<2x32xf32>
    %94 = math.tanh %93 : vector<2x32xf32>
    %cst_41 = arith.constant 1.000000e+00 : f32
    %95 = vector.broadcast %cst_41 : f32 to vector<2x32xf32>
    %96 = arith.subf %95, %89 : vector<2x32xf32>
    %97 = arith.mulf %96, %94 : vector<2x32xf32>
    %98 = arith.mulf %89, %69 : vector<2x32xf32>
    %99 = arith.addf %97, %98 : vector<2x32xf32>
    %100 = vector.extract_strided_slice %34 {offsets = [0, 32], sizes = [2, 32], strides = [1, 1]} : vector<2x64xf32> to vector<2x32xf32>
    %101 = tpu.concatenate %99, %100, %26 in 1 : vector<2x32xf32>, vector<2x32xf32>, vector<2x64xf32> -> vector<2x128xf32>
    %c48 = arith.constant 48 : index
    %c0_42 = arith.constant 0 : index
    %102 = vector.load %arg4[%c48, %c0_42] : memref<408x96xf32, #tpu.memory_space<vmem>>, vector<128x8xf32>
    %cst_43 = arith.constant dense<0.000000e+00> : vector<2x8xf32>
    %103 = tpu.matmul %101, %102, %cst_43 {dimension_numbers = #tpu.dot_dimension_numbers<[1], [0], [0], [1], [0, 0, 1, 1], [], []>} : vector<2x128xf32>, vector<128x8xf32>, vector<2x8xf32> -> vector<2x8xf32>
    %c402 = arith.constant 402 : index
    %c0_44 = arith.constant 0 : index
    %104 = vector.load %arg4[%c402, %c0_44] : memref<408x96xf32, #tpu.memory_space<vmem>>, vector<1x8xf32>
    %105 = vector.broadcast %104 : vector<1x8xf32> to vector<2x8xf32>
    %106 = arith.addf %103, %105 : vector<2x8xf32>
    %cst_45 = arith.constant 0.000000e+00 : f32
    %107 = vector.broadcast %cst_45 : f32 to vector<2x48xf32>
    %108 = tpu.concatenate %106, %67, %99, %22, %107 in 1 : vector<2x8xf32>, vector<2x32xf32>, vector<2x32xf32>, vector<2x8xf32>, vector<2x48xf32> -> vector<2x128xf32>
    %c0_46 = arith.constant 0 : index
    %c0_47 = arith.constant 0 : index
    %109 = vector.load %arg5[%c0_46, %c0_47] : memref<2x128xf32, #tpu.memory_space<vmem>>, vector<2x128xf32>
    tpu.vector_store %arg5[%c0_46, %c0_47], %108 {strides = array<i32>} : memref<2x128xf32, #tpu.memory_space<vmem>>, vector<2x128xf32>,
    return
  }
}

</mosaic_0001>

<llo_original>
// kernel: tpu_custom_call.1
$region0: #{tpu_custom_call.1}
  #allocation0 [shape = 'u32[]', space=smem, size = 0x4, offset = 0x4, fixed_abs, tag = 'smem constant byte address 0x4 - core index']
  #allocation1 [shape = 'u32[72,128]{1,0:T(1,128)}', space=vmem, size = 0x9000, scoped, tag = 'internal scratch']
  %s0 = inlined_call_operand.vmem [shape: f32[2,16], index: 0, kind: input, shape index: {}]
  %s1 = inlined_call_operand.vmem [shape: f32[2,2,32], index: 1, kind: input, shape index: {}]
  %s2 = inlined_call_operand.vmem [shape: f32[2,8,64], index: 2, kind: input, shape index: {}]
  %s3 = inlined_call_operand.vmem [shape: f32[2,8,32], index: 3, kind: input, shape index: {}]
  %s4 = inlined_call_operand.vmem [shape: f32[408,96], index: 4, kind: input, shape index: {}]
  %s5 = inlined_call_operand.hbm [shape: f32[2,128], index: 5, kind: output, shape index: {}]
  %s6 = sld [smem:[#allocation0]]
  $region30: #{tpu_custom_call.1} parent=0
    _
  %s8 = ssub.s32 1, %s6
  %s9 = scalar_select 0, %s8, %s6
  $region1: #{tpu_custom_call.1} parent=0
    #allocation2 [shape = 'u8[1024]{0}', space=vmem, size = 0x400, scoped, tag = 'output window, operand 0, single buffered']
    #allocation3 [shape = 's32[1]{0}', space=sflag, size = 0x4, scoped, tag = 'scoped memory for tpu_custom_call.1']
    %10 = vsyncpa [#allocation3], 0
    // Predicated region
    $region2: #{tpu_custom_call.1} parent=1 // pred_check
      _
    $region3: #{tpu_custom_call.1} parent=1 // pred_check_branch
      %12 = sbr.rel (0) target = $region5
    $region4: #{tpu_custom_call.1} parent=1 // pred_region
      _
    $region5: #{tpu_custom_call.1} parent=1 // pred_fallthru
      _
    // Predicated region
    $region6: #{tpu_custom_call.1} parent=1 // pred_check
      _
    $region7: #{tpu_custom_call.1} parent=1 // pred_check_branch
      %14 = sbr.rel (0) target = $region9
    $region8: #{tpu_custom_call.1} parent=1 // pred_region
      _
    $region9: #{tpu_custom_call.1} parent=1 // pred_fallthru
      _
    // Predicated region
    $region10: #{tpu_custom_call.1} parent=1 // pred_check
      _
    $region11: #{tpu_custom_call.1} parent=1 // pred_check_branch
      %16 = sbr.rel (0) target = $region13
    $region12: #{tpu_custom_call.1} parent=1 // pred_region
      _
    $region13: #{tpu_custom_call.1} parent=1 // pred_fallthru
      _
    // Predicated region
    $region14: #{tpu_custom_call.1} parent=1 // pred_check
      _
    $region15: #{tpu_custom_call.1} parent=1 // pred_check_branch
      %18 = sbr.rel (0) target = $region17
    $region16: #{tpu_custom_call.1} parent=1 // pred_region
      _
    $region17: #{tpu_custom_call.1} parent=1 // pred_fallthru
      _
    // Predicated region
    $region18: #{tpu_custom_call.1} parent=1 // pred_check
      _
    $region19: #{tpu_custom_call.1} parent=1 // pred_check_branch
      %20 = sbr.rel (0) target = $region21
    $region20: #{tpu_custom_call.1} parent=1 // pred_region
      _
    $region21: #{tpu_custom_call.1} parent=1 // pred_fallthru
      _
    %s21 = scalar_lea.vmem %s1, 2
    %v22 = vld [vmem:[%s21] sm:$0x3]
    %v23 = vld [vmem:[%s4] sm:$0xff]
    %v24 = vld [vmem:[%s4 + $0x8] sm:$0xff]
    %v25 = vld [vmem:[%s4 + $0x10] sm:$0xff]
    %v26 = vld [vmem:[%s4 + $0x18] sm:$0xff]
    %vm27 = vcmask 261120
    %v29 = vsel %vm27, %v22, 0
    %31 = vmatpush.msra.mxu0 0.0
    %32 = vmatpush.msra.mxu0 0.0
    %33 = vmatpush.msra.mxu0 0.0
    %34 = vmatpush.msra.mxu0 0.0
    %35 = vmatpush.msra.mxu0 0.0
    %36 = vmatpush.msra.mxu0 0.0
    %37 = vmatpush.msra.mxu0 0.0
    %38 = vmatpush.msra.mxu0 0.0
    %39 = vmatpush.msra.mxu0 0.0
    %40 = vmatpush.msra.mxu0 0.0
    %41 = vmatpush.msra.mxu0 0.0
    %42 = vmatpush.msra.mxu0 0.0
    %43 = vmatpush.msra.mxu0 %v26
    %44 = vmatpush.msra.mxu0 %v25
    %45 = vmatpush.msra.mxu0 %v24
    %46 = vmatpush.msra.mxu0 %v23
    %47 = vmatmul.f32.gmra.mxu0 %v29
    %v48 = vpop.f32.mrf.mxu0
    %v49 = vadd.f32 0.0, %v48
    %50 = vdwg.mxu0
    %v51 = vld [vmem:[%s3] sm:$0xff]
    %v52 = vld [vmem:[%s3 + $0x8] sm:$0xff]
    %v54 = vrot.slane %v49, 1
    %v55 = vperm.slane %v49, 0
    %v56 = vperm.slane %v54, 0
    %v59 = vadd.f32 %v51, %v55
    %v60 = vadd.f32 %v52, %v56
    %v61 = vtanh.pop %v59
    %v62 = vtanh.pop %v60
    %v63 = vld [vmem:[%s4 + $0x190] sm:$0x1]
    %v64 = vperm.slane %v63, 0
    %v65 = vmul.f32 %v61, %v64
    %v66 = vmul.f32 %v62, %v64
    %v67 = vsel %vm27, %v65, 0.0
    %68 = vadd.xlane.f32.xlu0 %v67
    %v69 = vpop.xlane.xlu0 %68
    %v70 = vsel %vm27, %v66, 0.0
    %71 = vadd.xlane.f32.xlu0 %v70
    %v72 = vpop.xlane.xlu0 %71
    %v75 = vlaneseq
    %v76 = vand.u32 %v75, 127
    %v77 = vperm.slane %v69, %v76
    %v78 = vperm.slane %v72, %v76
    %vm79 = vcmask 1041409
    %v80 = vsel %vm79, %v78, %v77
    %vm82 = vcmask 58368
    %v83 = vsel %vm82, %v80, -inf
    %84 = vmax.xlane.f32.xlu0 %v83
    %v85 = vpop.xlane.xlu0 %84
    %v87 = vperm.slane %v85, 0
    %v88 = vperm.slane %v85, 1
    %v91 = vsub.f32 %v69, %v87
    %v92 = vsub.f32 %v72, %v88
    %v93 = vmul.f32 %v91, 1.442695
    %v94 = vpow.pop %v93
    %v95 = vmul.f32 %v92, 1.442695
    %v96 = vpow.pop %v95
    %99 = vset.pattern.permute.xlu0 0
    %100 = vperm.xlu0 %99, %v94
    %v101 = vpop.permute.xlu0 %100
    %102 = vset.pattern.permute.xlu0 0
    %103 = vperm.xlu0 %102, %v96
    %v104 = vpop.permute.xlu0 %103
    %v105 = vperm.slane %v101, %v76
    %v106 = vperm.slane %v104, %v76
    %v107 = vsel %vm79, %v106, %v105
    %v109 = vsel %vm82, %v107, 0.0
    %110 = vadd.xlane.f32.xlu0 %v109
    %v111 = vpop.xlane.xlu0 %110
    %v113 = vperm.slane %v111, 0
    %v114 = vperm.slane %v111, 1
    %v117 = vrcp.pop %v113
    %v118 = vmul.f32 %v113, %v117
    %v119 = vsub.f32 1.0, %v118
    %v120 = vmul.f32 %v117, %v119
    %v121 = vadd.f32 %v117, %v120
    %vm122 = vweird.f32 %v113
    %vm123 = vweird.f32 %v117
    %vm124 = vmor %vm122, %vm123
    %v125 = vsel %vm124, %v117, %v121
    %v126 = vand.u32 2147483647, %v113
    %vm127 = vcmp.eq.f32.partialorder %v126, 8.507059e+37
    %v128 = vand.u32 %v113, 2147483648
    %v129 = vor.u32 1.1754944e-38, %v128
    %v130 = vsel %vm127, %v129, %v125
    %v131 = vmul.f32 %v94, %v130
    %v132 = vrcp.pop %v114
    %v133 = vmul.f32 %v114, %v132
    %v134 = vsub.f32 1.0, %v133
    %v135 = vmul.f32 %v132, %v134
    %v136 = vadd.f32 %v132, %v135
    %vm137 = vweird.f32 %v114
    %vm138 = vweird.f32 %v132
    %vm139 = vmor %vm137, %vm138
    %v140 = vsel %vm139, %v132, %v136
    %v141 = vand.u32 2147483647, %v114
    %vm142 = vcmp.eq.f32.partialorder %v141, 8.507059e+37
    %v143 = vand.u32 %v114, 2147483648
    %v144 = vor.u32 1.1754944e-38, %v143
    %v145 = vsel %vm142, %v144, %v140
    %v146 = vmul.f32 %v96, %v145
    %v147 = vld [vmem:[%s2] sm:$0xff]
    %v148 = vld [vmem:[%s2 + $0x8] sm:$0xff]
    %150 = vset.pattern.permute.xlu0 0
    %151 = vperm.xlu0 %150, %v131
    %v152 = vpop.permute.xlu0 %151
    %v153 = vperm.slane %v152, %v76
    %vm154 = vcmask 64512
    %v155 = vsel %vm154, %v153, 0
    %157 = vmatpush.msra.mxu0 0.0
    %158 = vmatpush.msra.mxu0 0.0
    %159 = vmatpush.msra.mxu0 0.0
    %160 = vmatpush.msra.mxu0 0.0
    %161 = vmatpush.msra.mxu0 0.0
    %162 = vmatpush.msra.mxu0 0.0
    %163 = vmatpush.msra.mxu0 0.0
    %164 = vmatpush.msra.mxu0 0.0
    %165 = vmatpush.msra.mxu0 0.0
    %166 = vmatpush.msra.mxu0 0.0
    %167 = vmatpush.msra.mxu0 0.0
    %168 = vmatpush.msra.mxu0 0.0
    %169 = vmatpush.msra.mxu0 0.0
    %170 = vmatpush.msra.mxu0 0.0
    %171 = vmatpush.msra.mxu0 0.0
    %172 = vmatpush.msra.mxu0 %v147
    %173 = vmatmul.f32.gmra.mxu0 %v155
    %v174 = vpop.f32.mrf.mxu0
    %v175 = vadd.f32 0.0, %v174
    %176 = vdwg.mxu0
    %178 = vset.pattern.permute.xlu0 0
    %179 = vperm.xlu0 %178, %v146
    %v180 = vpop.permute.xlu0 %179
    %v181 = vperm.slane %v180, %v76
    %v182 = vsel %vm154, %v181, 0
    %184 = vmatpush.msra.mxu0 0.0
    %185 = vmatpush.msra.mxu0 0.0
    %186 = vmatpush.msra.mxu0 0.0
    %187 = vmatpush.msra.mxu0 0.0
    %188 = vmatpush.msra.mxu0 0.0
    %189 = vmatpush.msra.mxu0 0.0
    %190 = vmatpush.msra.mxu0 0.0
    %191 = vmatpush.msra.mxu0 0.0
    %192 = vmatpush.msra.mxu0 0.0
    %193 = vmatpush.msra.mxu0 0.0
    %194 = vmatpush.msra.mxu0 0.0
    %195 = vmatpush.msra.mxu0 0.0
    %196 = vmatpush.msra.mxu0 0.0
    %197 = vmatpush.msra.mxu0 0.0
    %198 = vmatpush.msra.mxu0 0.0
    %199 = vmatpush.msra.mxu0 %v148
    %200 = vmatmul.f32.gmra.mxu0 %v182
    %v201 = vpop.f32.mrf.mxu0
    %v202 = vadd.f32 0.0, %v201
    %203 = vdwg.mxu0
    %v204 = vld [vmem:[%s4 + $0x191] sm:$0x1]
    %v205 = vld [vmem:[%s0] sm:$0x3]
    %v206 = vld [vmem:[%s4 + $0x20] sm:$0xff]
    %v207 = vld [vmem:[%s4 + $0x28] sm:$0xff]
    %v208 = vperm.slane %v204, 0
    %vm209 = vcmask 130048
    %v211 = vsel %vm209, %v205, 0
    %213 = vmatpush.msra.mxu0 0.0
    %214 = vmatpush.msra.mxu0 0.0
    %215 = vmatpush.msra.mxu0 0.0
    %216 = vmatpush.msra.mxu0 0.0
    %217 = vmatpush.msra.mxu0 0.0
    %218 = vmatpush.msra.mxu0 0.0
    %219 = vmatpush.msra.mxu0 0.0
    %220 = vmatpush.msra.mxu0 0.0
    %221 = vmatpush.msra.mxu0 0.0
    %222 = vmatpush.msra.mxu0 0.0
    %223 = vmatpush.msra.mxu0 0.0
    %224 = vmatpush.msra.mxu0 0.0
    %225 = vmatpush.msra.mxu0 0.0
    %226 = vmatpush.msra.mxu0 0.0
    %227 = vmatpush.msra.mxu0 %v207
    %228 = vmatpush.msra.mxu0 %v206
    %229 = vmatmul.f32.gmra.mxu0 %v211
    %v230 = vpop.f32.mrf.mxu0
    %v231 = vadd.f32 %v208, %v230
    %232 = vdwg.mxu0
    %v233 = vmax.f32 %v231, 0.0
    %v236 = vrot.slane %v202, 7
    %v237 = vsel %vm79, %v236, %v175
    %238 = vrot.lane.b32.xlu0 %v237, 64
    %v239 = vpop.permute.xlu0 %238
    %vm241 = vcmask 523264
    %v242 = vsel %vm241, %v233, %v239
    %v243 = vld [vmem:[%s1] sm:$0x3]
    %v244 = vld [vmem:[%s4 + $0xb0] sm:$0xff]
    %v245 = vld [vmem:[%s4 + $0xb8] sm:$0xff]
    %v246 = vld [vmem:[%s4 + $0xc0] sm:$0xff]
    %v247 = vld [vmem:[%s4 + $0xc8] sm:$0xff]
    %v248 = vld [vmem:[%s4 + $0xd0] sm:$0xff]
    %v249 = vld [vmem:[%s4 + $0xd8] sm:$0xff]
    %v250 = vld [vmem:[%s4 + $0xe0] sm:$0xff]
    %v251 = vld [vmem:[%s4 + $0xe8] sm:$0xff]
    %v252 = vld [vmem:[%s4 + $0xf0] sm:$0xff]
    %v253 = vld [vmem:[%s4 + $0xf8] sm:$0xff]
    %v254 = vld [vmem:[%s4 + $0x100] sm:$0xff]
    %v255 = vld [vmem:[%s4 + $0x108] sm:$0xff]
    %v256 = vld [vmem:[%s4 + $0x110] sm:$0xff]
    %v257 = vld [vmem:[%s4 + $0x118] sm:$0xff]
    %v258 = vld [vmem:[%s4 + $0x120] sm:$0xff]
    %v259 = vld [vmem:[%s4 + $0x128] sm:$0xff]
    %v260 = vld [vmem:[%s4 + $0x150] sm:$0xff]
    %v261 = vld [vmem:[%s4 + $0x158] sm:$0xff]
    %v262 = vld [vmem:[%s4 + $0x160] sm:$0xff]
    %v263 = vld [vmem:[%s4 + $0x168] sm:$0xff]
    %v264 = vld [vmem:[%s4 + $0x193] sm:$0x1]
    %v265 = vperm.slane %v264, 0
    %266 = vmatpush.msra.mxu0 %v259
    %267 = vmatpush.msra.mxu0 %v258
    %268 = vmatpush.msra.mxu0 %v257
    %269 = vmatpush.msra.mxu0 %v256
    %270 = vmatpush.msra.mxu0 %v255
    %271 = vmatpush.msra.mxu0 %v254
    %272 = vmatpush.msra.mxu0 %v253
    %273 = vmatpush.msra.mxu0 %v252
    %274 = vmatpush.msra.mxu0 %v251
    %275 = vmatpush.msra.mxu0 %v250
    %276 = vmatpush.msra.mxu0 %v249
    %277 = vmatpush.msra.mxu0 %v248
    %278 = vmatpush.msra.mxu0 %v247
    %279 = vmatpush.msra.mxu0 %v246
    %280 = vmatpush.msra.mxu0 %v245
    %281 = vmatpush.msra.mxu0 %v244
    %282 = vmatmul.f32.gmra.mxu0 %v242
    %v283 = vpop.f32.mrf.mxu0
    %v284 = vadd.f32 %v265, %v283
    %285 = vdwg.mxu0
    %v286 = vld [vmem:[%s4 + $0x195] sm:$0x1]
    %v287 = vperm.slane %v286, 0
    %v289 = vsel %vm27, %v243, 0
    %291 = vmatpush.msra.mxu0 0.0
    %292 = vmatpush.msra.mxu0 0.0
    %293 = vmatpush.msra.mxu0 0.0
    %294 = vmatpush.msra.mxu0 0.0
    %295 = vmatpush.msra.mxu0 0.0
    %296 = vmatpush.msra.mxu0 0.0
    %297 = vmatpush.msra.mxu0 0.0
    %298 = vmatpush.msra.mxu0 0.0
    %299 = vmatpush.msra.mxu0 0.0
    %300 = vmatpush.msra.mxu0 0.0
    %301 = vmatpush.msra.mxu0 0.0
    %302 = vmatpush.msra.mxu0 0.0
    %303 = vmatpush.msra.mxu0 %v263
    %304 = vmatpush.msra.mxu0 %v262
    %305 = vmatpush.msra.mxu0 %v261
    %306 = vmatpush.msra.mxu0 %v260
    %307 = vmatmul.f32.gmra.mxu0 %v289
    %v308 = vpop.f32.mrf.mxu0
    %v309 = vadd.f32 %v287, %v308
    %310 = vdwg.mxu0
    %v311 = vadd.f32 %v284, %v309
    %v312 = vxor.u32 %v311, 2147483648
    %v313 = vmul.f32 %v312, 1.442695
    %v314 = vpow.pop %v313
    %v315 = vadd.f32 %v314, 1.0
    %v316 = vrcp.pop %v315
    %v317 = vmul.f32 %v315, %v316
    %v318 = vsub.f32 1.0, %v317
    %v319 = vmul.f32 %v316, %v318
    %v320 = vadd.f32 %v316, %v319
    %vm321 = vweird.f32 %v315
    %vm322 = vweird.f32 %v316
    %vm323 = vmor %vm321, %vm322
    %v324 = vsel %vm323, %v316, %v320
    %v325 = vand.u32 2147483647, %v315
    %vm326 = vcmp.eq.f32.partialorder %v325, 8.507059e+37
    %v327 = vand.u32 %v315, 2147483648
    %v328 = vor.u32 1.1754944e-38, %v327
    %v329 = vsel %vm326, %v328, %v324
    %v330 = vmul.f32 1.0, %v329
    %332 = vrot.lane.b32.xlu0 %v309, 64
    %v333 = vpop.permute.xlu0 %332
    %v335 = vmul.f32 %v330, %v333
    %337 = vrot.lane.b32.xlu0 %v335, 64
    %v338 = vpop.permute.xlu0 %337
    %v340 = vadd.f32 %v284, %v338
    %v341 = vtanh.pop %v340
    %v342 = vsub.f32 1.0, %v330
    %344 = vrot.lane.b32.xlu0 %v341, 96
    %v345 = vpop.permute.xlu0 %344
    %v347 = vmul.f32 %v342, %v345
    %348 = vrot.lane.b32.xlu0 %v243, 32
    %v349 = vpop.permute.xlu0 %348
    %v351 = vmul.f32 %v330, %v349
    %v352 = vadd.f32 %v347, %v351
    %v353 = vld [vmem:[%s21] sm:$0x3]
    %v354 = vld [vmem:[%s4 + $0x130] sm:$0xff]
    %v355 = vld [vmem:[%s4 + $0x138] sm:$0xff]
    %v356 = vld [vmem:[%s4 + $0x140] sm:$0xff]
    %v357 = vld [vmem:[%s4 + $0x148] sm:$0xff]
    %v358 = vld [vmem:[%s4 + $0x170] sm:$0xff]
    %v359 = vld [vmem:[%s4 + $0x178] sm:$0xff]
    %v360 = vld [vmem:[%s4 + $0x180] sm:$0xff]
    %v361 = vld [vmem:[%s4 + $0x188] sm:$0xff]
    %v362 = vld [vmem:[%s4 + $0x194] sm:$0x1]
    %v363 = vperm.slane %v362, 0
    %365 = vrot.lane.b32.xlu0 %v352, 96
    %v366 = vpop.permute.xlu0 %365
    %v367 = vsel %vm27, %v366, 0
    %369 = vmatpush.msra.mxu0 0.0
    %370 = vmatpush.msra.mxu0 0.0
    %371 = vmatpush.msra.mxu0 0.0
    %372 = vmatpush.msra.mxu0 0.0
    %373 = vmatpush.msra.mxu0 0.0
    %374 = vmatpush.msra.mxu0 0.0
    %375 = vmatpush.msra.mxu0 0.0
    %376 = vmatpush.msra.mxu0 0.0
    %377 = vmatpush.msra.mxu0 0.0
    %378 = vmatpush.msra.mxu0 0.0
    %379 = vmatpush.msra.mxu0 0.0
    %380 = vmatpush.msra.mxu0 0.0
    %381 = vmatpush.msra.mxu0 %v357
    %382 = vmatpush.msra.mxu0 %v356
    %383 = vmatpush.msra.mxu0 %v355
    %384 = vmatpush.msra.mxu0 %v354
    %385 = vmatmul.f32.gmra.mxu0 %v367
    %v386 = vpop.f32.mrf.mxu0
    %v387 = vadd.f32 %v363, %v386
    %388 = vdwg.mxu0
    %v389 = vld [vmem:[%s4 + $0x196] sm:$0x1]
    %v390 = vperm.slane %v389, 0
    %v392 = vsel %vm27, %v353, 0
    %394 = vmatpush.msra.mxu0 0.0
    %395 = vmatpush.msra.mxu0 0.0
    %396 = vmatpush.msra.mxu0 0.0
    %397 = vmatpush.msra.mxu0 0.0
    %398 = vmatpush.msra.mxu0 0.0
    %399 = vmatpush.msra.mxu0 0.0
    %400 = vmatpush.msra.mxu0 0.0
    %401 = vmatpush.msra.mxu0 0.0
    %402 = vmatpush.msra.mxu0 0.0
    %403 = vmatpush.msra.mxu0 0.0
    %404 = vmatpush.msra.mxu0 0.0
    %405 = vmatpush.msra.mxu0 0.0
    %406 = vmatpush.msra.mxu0 %v361
    %407 = vmatpush.msra.mxu0 %v360
    %408 = vmatpush.msra.mxu0 %v359
    %409 = vmatpush.msra.mxu0 %v358
    %410 = vmatmul.f32.gmra.mxu0 %v392
    %v411 = vpop.f32.mrf.mxu0
    %v412 = vadd.f32 %v390, %v411
    %413 = vdwg.mxu0
    %v414 = vadd.f32 %v387, %v412
    %v415 = vxor.u32 %v414, 2147483648
    %v416 = vmul.f32 %v415, 1.442695
    %v417 = vpow.pop %v416
    %v418 = vadd.f32 %v417, 1.0
    %v419 = vrcp.pop %v418
    %v420 = vmul.f32 %v418, %v419
    %v421 = vsub.f32 1.0, %v420
    %v422 = vmul.f32 %v419, %v421
    %v423 = vadd.f32 %v419, %v422
    %vm424 = vweird.f32 %v418
    %vm425 = vweird.f32 %v419
    %vm426 = vmor %vm424, %vm425
    %v427 = vsel %vm426, %v419, %v423
    %v428 = vand.u32 2147483647, %v418
    %vm429 = vcmp.eq.f32.partialorder %v428, 8.507059e+37
    %v430 = vand.u32 %v418, 2147483648
    %v431 = vor.u32 1.1754944e-38, %v430
    %v432 = vsel %vm429, %v431, %v427
    %v433 = vmul.f32 1.0, %v432
    %435 = vrot.lane.b32.xlu0 %v412, 64
    %v436 = vpop.permute.xlu0 %435
    %v438 = vmul.f32 %v433, %v436
    %440 = vrot.lane.b32.xlu0 %v438, 64
    %v441 = vpop.permute.xlu0 %440
    %v443 = vadd.f32 %v387, %v441
    %v444 = vtanh.pop %v443
    %v445 = vsub.f32 1.0, %v433
    %447 = vrot.lane.b32.xlu0 %v444, 96
    %v448 = vpop.permute.xlu0 %447
    %v450 = vmul.f32 %v445, %v448
    %451 = vrot.lane.b32.xlu0 %v353, 32
    %v452 = vpop.permute.xlu0 %451
    %v454 = vmul.f32 %v433, %v452
    %v455 = vadd.f32 %v450, %v454
    %457 = vrot.lane.b32.xlu0 %v455, 96
    %v458 = vpop.permute.xlu0 %457
    %v460 = vsel %vm27, %v458, %v233
    %v461 = vsel %vm241, %v460, %v239
    %v462 = vld [vmem:[%s4 + $0x30] sm:$0xff]
    %v463 = vld [vmem:[%s4 + $0x38] sm:$0xff]
    %v464 = vld [vmem:[%s4 + $0x40] sm:$0xff]
    %v465 = vld [vmem:[%s4 + $0x48] sm:$0xff]
    %v466 = vld [vmem:[%s4 + $0x50] sm:$0xff]
    %v467 = vld [vmem:[%s4 + $0x58] sm:$0xff]
    %v468 = vld [vmem:[%s4 + $0x60] sm:$0xff]
    %v469 = vld [vmem:[%s4 + $0x68] sm:$0xff]
    %v470 = vld [vmem:[%s4 + $0x70] sm:$0xff]
    %v471 = vld [vmem:[%s4 + $0x78] sm:$0xff]
    %v472 = vld [vmem:[%s4 + $0x80] sm:$0xff]
    %v473 = vld [vmem:[%s4 + $0x88] sm:$0xff]
    %v474 = vld [vmem:[%s4 + $0x90] sm:$0xff]
    %v475 = vld [vmem:[%s4 + $0x98] sm:$0xff]
    %v476 = vld [vmem:[%s4 + $0xa0] sm:$0xff]
    %v477 = vld [vmem:[%s4 + $0xa8] sm:$0xff]
    %v478 = vld [vmem:[%s4 + $0x192] sm:$0x1]
    %v479 = vperm.slane %v478, 0
    %480 = vmatpush.msra.mxu0 %v477
    %481 = vmatpush.msra.mxu0 %v476
    %482 = vmatpush.msra.mxu0 %v475
    %483 = vmatpush.msra.mxu0 %v474
    %484 = vmatpush.msra.mxu0 %v473
    %485 = vmatpush.msra.mxu0 %v472
    %486 = vmatpush.msra.mxu0 %v471
    %487 = vmatpush.msra.mxu0 %v470
    %488 = vmatpush.msra.mxu0 %v469
    %489 = vmatpush.msra.mxu0 %v468
    %490 = vmatpush.msra.mxu0 %v467
    %491 = vmatpush.msra.mxu0 %v466
    %492 = vmatpush.msra.mxu0 %v465
    %493 = vmatpush.msra.mxu0 %v464
    %494 = vmatpush.msra.mxu0 %v463
    %495 = vmatpush.msra.mxu0 %v462
    %496 = vmatmul.f32.gmra.mxu0 %v461
    %v497 = vpop.f32.mrf.mxu0
    %v498 = vadd.f32 %v479, %v497
    %499 = vdwg.mxu0
    %500 = vrot.lane.b32.xlu0 %v352, 104
    %v501 = vpop.permute.xlu0 %500
    %503 = vrot.lane.b32.xlu0 %v455, 8
    %v504 = vpop.permute.xlu0 %503
    %v506 = vadd.s32 %v76, 4294967224
    %v507 = vperm.slane %v152, %v506
    %v508 = vperm.slane %v180, %v506
    %v509 = vsel %vm79, %v508, %v507
    %v511 = vsel %vm154, %v498, %v501
    %vm512 = vcmask 326656
    %v513 = vsel %vm512, %v511, %v504
    %vm514 = vcmask 588800
    %v515 = vsel %vm514, %v513, %v509
    %vm516 = vcmask 654336
    %v517 = vsel %vm516, %v515, 0.0
    %518 = vst [vmem:[#allocation2] sm:$0x3] %v517
    // Predicated region
    $region22: #{tpu_custom_call.1} parent=1 // pred_check
      _
    $region23: #{tpu_custom_call.1} parent=1 // pred_check_branch
      %520 = sbr.rel (0) target = $region25
    $region24: #{tpu_custom_call.1} parent=1 // pred_region
      %522 = vsyncadd [#allocation3], 0
      %s524 = sshll.u32 [#allocation2], 4
      %s525 = int_to_ptr.vmem [resolvable:$true] %s524
      %s526 = sshll.u32 %s5, 4
      %s527 = int_to_ptr.hbm [resolvable:$true] %s526
      %529 = dma.vmem_to_hbm [thread:$0]  %s525, 32, %s527, [#allocation3]
    $region25: #{tpu_custom_call.1} parent=1 // pred_fallthru
      _
    // Predicated region
    $region26: #{tpu_custom_call.1} parent=1 // pred_check
      _
    $region27: #{tpu_custom_call.1} parent=1 // pred_check_branch
      %531 = sbr.rel (0) target = $region29
    $region28: #{tpu_custom_call.1} parent=1 // pred_region
      %533 = dma.done [#allocation3], 32
    $region29: #{tpu_custom_call.1} parent=1 // pred_fallthru
      _
    %534 = vsyncpa [#allocation3], 1

</llo_original>
